<compile_context>
chip_gen: v7x
topology: tpu7x:2x2x1
jax: 0.10.0
libtpu: 0.0.40
codegen_flags: <defaults>
</compile_context>

<pallas_src>
import functools

import jax
import jax.numpy as jnp
from jax.experimental import pallas as pl
from jax.experimental.pallas import tpu as pltpu


def _round_up(x, m):
    return (x + m - 1) // m * m


def _cdiv(a, b):
    return -(-a // b)


def _span_dist_kernel(nums_ref, table_ref, out_ref, *, bins, pack, d):
    # nums_ref : (tile_rows, pack)    int32   pack span distances per output row
    # table_ref: (V, pack*d)          f32     table row r tiled `pack` times (resident)
    # out_ref  : (tile_rows, pack*d)  f32
    tile_rows, lanes = out_ref.shape
    vocab = table_ref.shape[0]

    nums = nums_ref[...]                                       # (tile_rows, pack)

    # Bucket index: number of static bin thresholds strictly exceeded.
    # B unrolled elementwise VPU compares; bins never leave the instruction stream.
    idx = jnp.zeros(nums.shape, dtype=jnp.int32)
    for b in bins:
        idx = idx + (nums > b).astype(jnp.int32)               # (tile_rows, pack)

    # Lane-replicate the per-row indices across their d-lane groups, ONCE
    # (hoisted out of the vocab loop): idx_b[r, j] = idx[r, j // d].
    if pack == 1:
        idx_b = jnp.broadcast_to(idx, (tile_rows, lanes))
    else:
        lane_ids = jax.lax.broadcasted_iota(jnp.int32, (tile_rows, lanes), 1)
        idx_b = jnp.zeros((tile_rows, lanes), dtype=jnp.int32)
        for p in range(pack):
            in_group = (lane_ids >= p * d) & (lane_ids < (p + 1) * d)
            idx_b = jnp.where(in_group, idx[:, p:p + 1], idx_b)

    # Embedding gather as V-1 lane-parallel selects over full 128-lane vregs
    # (accumulator initialised with row 0) -- bit-exact, VPU only, no MXU.
    acc = jnp.broadcast_to(table_ref[pl.ds(0, 1), :], (tile_rows, lanes))
    for vv in range(1, vocab):
        row = table_ref[pl.ds(vv, 1), :]                       # (1, lanes)
        acc = jnp.where(idx_b == vv, row, acc)

    out_ref[...] = acc.astype(out_ref.dtype)
    # TODO(synk): Dropout(args.dropout_span) is identity in eval mode; a
    # training-mode variant would add pltpu.prng_seed + pltpu.prng_random_bits.
    # (A bf16 out dtype would further halve store bandwidth on v5e if the
    # consumer tolerates it; kept f32 here to stay bit-exact vs the module.)


def span_dist(nums, table, bins, *, tile_n=32768):
    """Bucketized-distance embedding lookup (SpanDist.forward, eval mode).

    nums : (N,) integer span distances.
    table: (V, D) float32 embedding table with V = len(bins) + 1.
    bins : static sequence of ints (the module's [2**i ...] thresholds).
    tile_n: requested logical rows per grid step (rounded/capped internally).
    """
    n = int(nums.shape[0])
    v, d = table.shape
    bins = tuple(int(b) for b in bins)
    assert v == len(bins) + 1

    # Lane packing: `pack` logical rows of width d per 128-lane output row.
    pack = 128 // d if (d < 128 and 128 % d == 0) else 1
    lanes = pack * d

    rows = _cdiv(n, pack)
    n_in = rows * pack
    nums_i = nums.astype(jnp.int32)
    if n_in != n:                                   # tiny input-only pad
        nums_i = jnp.pad(nums_i, (0, n_in - n))
    nums2d = nums_i.reshape(rows, pack)

    table_t = jnp.tile(table.astype(jnp.float32), (1, pack))   # (V, lanes), tiny

    # Tile selection: big tiles (~1-8 MiB f32 output) for per-step-overhead
    # amortization, capped to keep >=2 grid steps when possible (v7x shards the
    # "parallel" axis across its 2 TensorCores) and to stay VMEM-safe.
    req = _round_up(max(tile_n // pack, 1), 8)
    req = min(req, 16384)                           # <= 8 MiB f32 output tile
    half = _round_up(_cdiv(rows, 2), 8)
    tile_rows = max(8, min(req, half, _round_up(rows, 8)))
    grid = _cdiv(rows, tile_rows)

    cost = pl.CostEstimate(
        flops=n * (len(bins) + v),
        transcendentals=0,
        bytes_accessed=n_in * 4 + rows * lanes * 4 + v * lanes * 4,
    )

    out = pl.pallas_call(
        functools.partial(_span_dist_kernel, bins=bins, pack=pack, d=d),
        out_shape=jax.ShapeDtypeStruct((rows, lanes), jnp.float32),
        grid=(grid,),
        in_specs=[
            pl.BlockSpec((tile_rows, pack), lambda i: (i, 0)),   # packed distances
            pl.BlockSpec((v, lanes), lambda i: (0, 0)),          # full table, resident
        ],
        out_specs=pl.BlockSpec((tile_rows, lanes), lambda i: (i, 0)),
        compiler_params=pltpu.CompilerParams(
            dimension_semantics=("parallel",),
        ),
        cost_estimate=cost,
    )(nums2d, table_t)

    # Unpack the lane-dense slab back to (N, D).  Pure layout plumbing; the
    # trailing slice only triggers when N is not a multiple of `pack`.
    out = out.reshape(rows * pack, d)
    if rows * pack != n:
        out = out[:n]
    return out


def reference_span_dist(nums, bins, table):
    idx = jnp.sum(nums[:, None] > bins[None, :], axis=1)
    return table[idx]


if __name__ == "__main__":
    key = jax.random.PRNGKey(0)

    # Synthetic config: args.bins = 4 -> bins = [1, 2, 4, 8]; distance_dim = 32.
    n_bins = 4
    embed_dim = 32
    vocab = n_bins + 1
    bins = [2 ** i for i in range(n_bins)]

    k_tab, k1, k2 = jax.random.split(key, 3)
    # Deterministic embedding weights (nn.Embedding default init ~ N(0, 1)).
    table = jax.random.normal(k_tab, (vocab, embed_dim), dtype=jnp.float32)
    bins_arr = jnp.array(bins, dtype=jnp.int32)

    # Example forward(args): a batch of 8 span distances, plus a ragged size
    # that exercises pack padding and the clipped partial last grid block.
    for kk, n in ((k1, 8), (k2, 100)):
        nums = jax.random.randint(kk, (n,), minval=0, maxval=20, dtype=jnp.int32)
        out = jax.block_until_ready(span_dist(nums, table, bins))
        ref = reference_span_dist(nums, bins_arr, table)
        assert out.shape == (n, embed_dim)
        assert jnp.array_equal(out, ref), f"mismatch vs reference at N={n}"

    print("KERNEL_OK")
</pallas_src>

<mosaic_0001>
module attributes {stable_mosaic.version = 11 : i64} {
  func.func @_span_dist_kernel(%arg0: i32, %arg1: memref<8x4xi32, #tpu.memory_space<vmem>>, %arg2: memref<5x128xf32, #tpu.memory_space<vmem>>, %arg3: memref<8x128xf32, #tpu.memory_space<vmem>>) attributes {dimension_semantics = [#tpu.dimension_semantics<parallel>], iteration_bounds = array<i64: 1>, scalar_prefetch = 0 : i64, scratch_operands = 0 : i64, tpu.core_type = #tpu.core_type<tc>, window_params = [{transform_indices = @transform_0, window_bounds = array<i64: 8, 4>}, {pipeline_mode = #tpu.pipeline_mode<synchronous>, transform_indices = @transform_1, window_bounds = array<i64: 5, 128>}, {transform_indices = @transform_2, window_bounds = array<i64: 8, 128>}]} {
    %c0 = arith.constant 0 : index
    %c0_0 = arith.constant 0 : index
    %0 = vector.load %arg1[%c0, %c0_0] : memref<8x4xi32, #tpu.memory_space<vmem>>, vector<8x4xi32>
    %c0_i32 = arith.constant 0 : i32
    %1 = vector.broadcast %c0_i32 : i32 to vector<8x4xi32>
    %c1_i32 = arith.constant 1 : i32
    %2 = vector.broadcast %c1_i32 : i32 to vector<8x4xi32>
    %3 = arith.cmpi sgt, %0, %2 : vector<8x4xi32>
    %4 = arith.extui %3 : vector<8x4xi1> to vector<8x4xi32>
    %5 = arith.addi %1, %4 : vector<8x4xi32>
    %c2_i32 = arith.constant 2 : i32
    %6 = vector.broadcast %c2_i32 : i32 to vector<8x4xi32>
    %7 = arith.cmpi sgt, %0, %6 : vector<8x4xi32>
    %8 = arith.extui %7 : vector<8x4xi1> to vector<8x4xi32>
    %9 = arith.addi %5, %8 : vector<8x4xi32>
    %c4_i32 = arith.constant 4 : i32
    %10 = vector.broadcast %c4_i32 : i32 to vector<8x4xi32>
    %11 = arith.cmpi sgt, %0, %10 : vector<8x4xi32>
    %12 = arith.extui %11 : vector<8x4xi1> to vector<8x4xi32>
    %13 = arith.addi %9, %12 : vector<8x4xi32>
    %c8_i32 = arith.constant 8 : i32
    %14 = vector.broadcast %c8_i32 : i32 to vector<8x4xi32>
    %15 = arith.cmpi sgt, %0, %14 : vector<8x4xi32>
    %16 = arith.extui %15 : vector<8x4xi1> to vector<8x4xi32>
    %17 = arith.addi %13, %16 : vector<8x4xi32>
    %18 = tpu.iota {dimensions = array<i32: 1>} : vector<8x128xi32>
    %c0_i32_1 = arith.constant 0 : i32
    %19 = vector.broadcast %c0_i32_1 : i32 to vector<8x128xi32>
    %c0_i32_2 = arith.constant 0 : i32
    %20 = vector.broadcast %c0_i32_2 : i32 to vector<8x128xi32>
    %21 = arith.cmpi sge, %18, %20 : vector<8x128xi32>
    %c32_i32 = arith.constant 32 : i32
    %22 = vector.broadcast %c32_i32 : i32 to vector<8x128xi32>
    %23 = arith.cmpi slt, %18, %22 : vector<8x128xi32>
    %24 = arith.andi %21, %23 : vector<8x128xi1>
    %25 = vector.extract_strided_slice %17 {offsets = [0, 0], sizes = [8, 1], strides = [1, 1]} : vector<8x4xi32> to vector<8x1xi32>
    %26 = vector.shape_cast %25 : vector<8x1xi32> to vector<8x1xi32>
    %27 = vector.broadcast %26 : vector<8x1xi32> to vector<8x128xi32>
    %28 = arith.select %24, %27, %19 : vector<8x128xi1>, vector<8x128xi32>
    %c32_i32_3 = arith.constant 32 : i32
    %29 = vector.broadcast %c32_i32_3 : i32 to vector<8x128xi32>
    %30 = arith.cmpi sge, %18, %29 : vector<8x128xi32>
    %c64_i32 = arith.constant 64 : i32
    %31 = vector.broadcast %c64_i32 : i32 to vector<8x128xi32>
    %32 = arith.cmpi slt, %18, %31 : vector<8x128xi32>
    %33 = arith.andi %30, %32 : vector<8x128xi1>
    %34 = vector.extract_strided_slice %17 {offsets = [0, 1], sizes = [8, 1], strides = [1, 1]} : vector<8x4xi32> to vector<8x1xi32>
    %35 = vector.shape_cast %34 : vector<8x1xi32> to vector<8x1xi32>
    %36 = vector.broadcast %35 : vector<8x1xi32> to vector<8x128xi32>
    %37 = arith.select %33, %36, %28 : vector<8x128xi1>, vector<8x128xi32>
    %c64_i32_4 = arith.constant 64 : i32
    %38 = vector.broadcast %c64_i32_4 : i32 to vector<8x128xi32>
    %39 = arith.cmpi sge, %18, %38 : vector<8x128xi32>
    %c96_i32 = arith.constant 96 : i32
    %40 = vector.broadcast %c96_i32 : i32 to vector<8x128xi32>
    %41 = arith.cmpi slt, %18, %40 : vector<8x128xi32>
    %42 = arith.andi %39, %41 : vector<8x128xi1>
    %43 = vector.extract_strided_slice %17 {offsets = [0, 2], sizes = [8, 1], strides = [1, 1]} : vector<8x4xi32> to vector<8x1xi32>
    %44 = vector.shape_cast %43 : vector<8x1xi32> to vector<8x1xi32>
    %45 = vector.broadcast %44 : vector<8x1xi32> to vector<8x128xi32>
    %46 = arith.select %42, %45, %37 : vector<8x128xi1>, vector<8x128xi32>
    %c96_i32_5 = arith.constant 96 : i32
    %47 = vector.broadcast %c96_i32_5 : i32 to vector<8x128xi32>
    %48 = arith.cmpi sge, %18, %47 : vector<8x128xi32>
    %c128_i32 = arith.constant 128 : i32
    %49 = vector.broadcast %c128_i32 : i32 to vector<8x128xi32>
    %50 = arith.cmpi slt, %18, %49 : vector<8x128xi32>
    %51 = arith.andi %48, %50 : vector<8x128xi1>
    %52 = vector.extract_strided_slice %17 {offsets = [0, 3], sizes = [8, 1], strides = [1, 1]} : vector<8x4xi32> to vector<8x1xi32>
    %53 = vector.shape_cast %52 : vector<8x1xi32> to vector<8x1xi32>
    %54 = vector.broadcast %53 : vector<8x1xi32> to vector<8x128xi32>
    %55 = arith.select %51, %54, %46 : vector<8x128xi1>, vector<8x128xi32>
    %c0_6 = arith.constant 0 : index
    %c0_7 = arith.constant 0 : index
    %56 = vector.load %arg2[%c0_6, %c0_7] : memref<5x128xf32, #tpu.memory_space<vmem>>, vector<1x128xf32>
    %57 = vector.shape_cast %56 : vector<1x128xf32> to vector<1x128xf32>
    %58 = vector.broadcast %57 : vector<1x128xf32> to vector<8x128xf32>
    %c1 = arith.constant 1 : index
    %c0_8 = arith.constant 0 : index
    %59 = vector.load %arg2[%c1, %c0_8] : memref<5x128xf32, #tpu.memory_space<vmem>>, vector<1x128xf32>
    %c1_i32_9 = arith.constant 1 : i32
    %60 = vector.broadcast %c1_i32_9 : i32 to vector<8x128xi32>
    %61 = arith.cmpi eq, %55, %60 : vector<8x128xi32>
    %62 = vector.shape_cast %59 : vector<1x128xf32> to vector<1x128xf32>
    %63 = vector.broadcast %62 : vector<1x128xf32> to vector<8x128xf32>
    %64 = arith.select %61, %63, %58 : vector<8x128xi1>, vector<8x128xf32>
    %c2 = arith.constant 2 : index
    %c0_10 = arith.constant 0 : index
    %65 = vector.load %arg2[%c2, %c0_10] : memref<5x128xf32, #tpu.memory_space<vmem>>, vector<1x128xf32>
    %c2_i32_11 = arith.constant 2 : i32
    %66 = vector.broadcast %c2_i32_11 : i32 to vector<8x128xi32>
    %67 = arith.cmpi eq, %55, %66 : vector<8x128xi32>
    %68 = vector.shape_cast %65 : vector<1x128xf32> to vector<1x128xf32>
    %69 = vector.broadcast %68 : vector<1x128xf32> to vector<8x128xf32>
    %70 = arith.select %67, %69, %64 : vector<8x128xi1>, vector<8x128xf32>
    %c3 = arith.constant 3 : index
    %c0_12 = arith.constant 0 : index
    %71 = vector.load %arg2[%c3, %c0_12] : memref<5x128xf32, #tpu.memory_space<vmem>>, vector<1x128xf32>
    %c3_i32 = arith.constant 3 : i32
    %72 = vector.broadcast %c3_i32 : i32 to vector<8x128xi32>
    %73 = arith.cmpi eq, %55, %72 : vector<8x128xi32>
    %74 = vector.shape_cast %71 : vector<1x128xf32> to vector<1x128xf32>
    %75 = vector.broadcast %74 : vector<1x128xf32> to vector<8x128xf32>
    %76 = arith.select %73, %75, %70 : vector<8x128xi1>, vector<8x128xf32>
    %c4 = arith.constant 4 : index
    %c0_13 = arith.constant 0 : index
    %77 = vector.load %arg2[%c4, %c0_13] : memref<5x128xf32, #tpu.memory_space<vmem>>, vector<1x128xf32>
    %c4_i32_14 = arith.constant 4 : i32
    %78 = vector.broadcast %c4_i32_14 : i32 to vector<8x128xi32>
    %79 = arith.cmpi eq, %55, %78 : vector<8x128xi32>
    %80 = vector.shape_cast %77 : vector<1x128xf32> to vector<1x128xf32>
    %81 = vector.broadcast %80 : vector<1x128xf32> to vector<8x128xf32>
    %82 = arith.select %79, %81, %76 : vector<8x128xi1>, vector<8x128xf32>
    %c0_15 = arith.constant 0 : index
    %c0_16 = arith.constant 0 : index
    %83 = vector.load %arg3[%c0_15, %c0_16] : memref<8x128xf32, #tpu.memory_space<vmem>>, vector<8x128xf32>
    tpu.vector_store %arg3[%c0_15, %c0_16], %82 {strides = array<i32>} : memref<8x128xf32, #tpu.memory_space<vmem>>, vector<8x128xf32>,
    return
  }
  func.func @transform_0(%arg0: i32) -> (i32, i32) {
    %c0_i32 = arith.constant 0 : i32
    %c0_i32_0 = arith.constant 0 : i32
    return %arg0, %c0_i32 : i32, i32
  }
  func.func @transform_1(%arg0: i32) -> (i32, i32) {
    %c0_i32 = arith.constant 0 : i32
    %c0_i32_0 = arith.constant 0 : i32
    %c0_i32_1 = arith.constant 0 : i32
    return %c0_i32, %c0_i32_0 : i32, i32
  }
  func.func @transform_2(%arg0: i32) -> (i32, i32) {
    %c0_i32 = arith.constant 0 : i32
    %c0_i32_0 = arith.constant 0 : i32
    return %arg0, %c0_i32 : i32, i32
  }
}

</mosaic_0001>

<llo_original>
// kernel: tpu_custom_call.1
$region0: #{tpu_custom_call.1}
  #allocation0 [shape = 'u32[]', space=smem, size = 0x4, offset = 0x4, fixed_abs, tag = 'smem constant byte address 0x4 - core index']
  #allocation1 [shape = 'u32[144,128]{1,0:T(1,128)}', space=vmem, size = 0x12000, scoped, tag = 'internal scratch']
  %s0 = inlined_call_operand.hbm [shape: s32[2,4], index: 0, kind: input, shape index: {}]
  %s1 = inlined_call_operand.hbm [shape: f32[5,128], index: 1, kind: input, shape index: {}]
  %s2 = inlined_call_operand.hbm [shape: f32[2,128], index: 2, kind: output, shape index: {}]
  %s3 = sld [smem:[#allocation0]]
  $region26: #{tpu_custom_call.1} parent=0
    _
  %s5 = ssub.s32 1, %s3
  %s6 = scalar_select 0, %s5, %s3
  $region1: #{tpu_custom_call.1} parent=0
    #allocation2 [shape = 'u8[4096]{0}', space=vmem, size = 0x1000, scoped, tag = 'input window, operand 0, single buffered']
    #allocation3 [shape = 's32[1]{0}', space=sflag, size = 0x4, scoped, tag = 'scoped memory for tpu_custom_call.1']
    #allocation4 [shape = 's32[1]{0}', space=sflag, size = 0x4, scoped, tag = 'scoped memory for tpu_custom_call.1']
    #allocation5 [shape = 'u8[4096]{0}', space=vmem, size = 0x1000, scoped, tag = 'input window, operand 1, single buffered']
    #allocation6 [shape = 's32[1]{0}', space=sflag, size = 0x4, scoped, tag = 'scoped memory for tpu_custom_call.1']
    #allocation7 [shape = 'u8[4096]{0}', space=vmem, size = 0x1000, scoped, tag = 'output window, operand 0, single buffered']
    %7 = vsyncpa [#allocation3], 0
    %8 = vsyncpa [#allocation6], 0
    %9 = vsyncpa [#allocation4], 0
    // Predicated region
    $region2: #{tpu_custom_call.1} parent=1 // pred_check
      _
    $region3: #{tpu_custom_call.1} parent=1 // pred_check_branch
      %11 = sbr.rel (0) target = $region5
    $region4: #{tpu_custom_call.1} parent=1 // pred_region
      %s13 = ssub.s32 128, 32
      %14 = vsyncadd [#allocation3], %s13
      %s15 = sshll.u32 [#allocation2], 4
      %s16 = int_to_ptr.vmem [resolvable:$true] %s15
      %21 = dma.hbm_to_vmem [thread:$0]  %s0, 32, %s16, [#allocation3], 32, 32, 2
    $region5: #{tpu_custom_call.1} parent=1 // pred_fallthru
      _
    // Predicated region
    $region6: #{tpu_custom_call.1} parent=1 // pred_check
      _
    $region7: #{tpu_custom_call.1} parent=1 // pred_check_branch
      %23 = sbr.rel (0) target = $region9
    $region8: #{tpu_custom_call.1} parent=1 // pred_region
      %s25 = ssub.s32 128, 128
      %26 = vsyncadd [#allocation6], %s25
      %s28 = sshll.u32 [#allocation5], 4
      %s29 = int_to_ptr.vmem [resolvable:$true] %s28
      %31 = dma.hbm_to_vmem [thread:$0]  %s1, 128, %s29, [#allocation6]
    $region9: #{tpu_custom_call.1} parent=1 // pred_fallthru
      _
    // Predicated region
    $region10: #{tpu_custom_call.1} parent=1 // pred_check
      _
    $region11: #{tpu_custom_call.1} parent=1 // pred_check_branch
      %33 = sbr.rel (0) target = $region13
    $region12: #{tpu_custom_call.1} parent=1 // pred_region
      %34 = dma.done [#allocation3], 128
    $region13: #{tpu_custom_call.1} parent=1 // pred_fallthru
      _
    // Predicated region
    $region14: #{tpu_custom_call.1} parent=1 // pred_check
      _
    $region15: #{tpu_custom_call.1} parent=1 // pred_check_branch
      %36 = sbr.rel (0) target = $region17
    $region16: #{tpu_custom_call.1} parent=1 // pred_region
      %37 = dma.done [#allocation6], 128
    $region17: #{tpu_custom_call.1} parent=1 // pred_fallthru
      _
    %v38 = vld [vmem:[#allocation2] sm:$0xff]
    %vm39 = vcmp.gt.s32.totalorder %v38, 1
    %v40 = vsel %vm39, 1, 0
    %vm41 = vcmp.gt.s32.totalorder %v38, 2
    %v42 = vsel %vm41, 1, 0
    %v43 = vadd.s32 %v40, %v42
    %vm44 = vcmp.gt.s32.totalorder %v38, 4
    %v45 = vsel %vm44, 1, 0
    %v46 = vadd.s32 %v43, %v45
    %vm47 = vcmp.gt.s32.totalorder %v38, 8
    %v48 = vsel %vm47, 1, 0
    %v49 = vadd.s32 %v46, %v48
    %v50 = vlaneseq
    %v51 = vand.u32 %v50, 127
    %vm52 = vcmp.ge.s32.totalorder %v51, 0
    %vm53 = vcmp.lt.s32.totalorder %v51, 32
    %vm54 = vmand %vm52, %vm53
    %55 = vset.pattern.permute.xlu0 0
    %56 = vperm.xlu0 %55, %v49
    %v57 = vpop.permute.xlu0 %56
    %v58 = vsel %vm54, %v57, 0
    %vm59 = vcmp.ge.s32.totalorder %v51, 32
    %vm60 = vcmp.lt.s32.totalorder %v51, 64
    %vm61 = vmand %vm59, %vm60
    %62 = vset.pattern.permute.xlu0 1
    %63 = vperm.xlu0 %62, %v49
    %v64 = vpop.permute.xlu0 %63
    %v65 = vsel %vm61, %v64, %v58
    %vm66 = vcmp.ge.s32.totalorder %v51, 64
    %vm67 = vcmp.lt.s32.totalorder %v51, 96
    %vm68 = vmand %vm66, %vm67
    %69 = vset.pattern.permute.xlu0 2
    %70 = vperm.xlu0 %69, %v49
    %v71 = vpop.permute.xlu0 %70
    %v72 = vsel %vm68, %v71, %v65
    %vm73 = vcmp.ge.s32.totalorder %v51, 96
    %vm74 = vcmp.lt.s32.totalorder %v51, 128
    %vm75 = vmand %vm73, %vm74
    %76 = vset.pattern.permute.xlu0 3
    %77 = vperm.xlu0 %76, %v49
    %v78 = vpop.permute.xlu0 %77
    %v79 = vsel %vm75, %v78, %v72
    %v80 = vld [vmem:[#allocation5] sm:$0x1]
    %v81 = vlaneseq
    %v82 = vshrl.u32 %v81, 7
    %v83 = vsub.s32 0, %v82
    %v84 = vrot.slane %v80, %v83
    %v85 = vld [vmem:[#allocation5 + $0x1] sm:$0x1]
    %vm86 = vcmp.eq.s32.totalorder %v79, 1
    %v87 = vlaneseq
    %v88 = vshrl.u32 %v87, 7
    %v89 = vsub.s32 0, %v88
    %v90 = vrot.slane %v85, %v89
    %v91 = vsel %vm86, %v90, %v84
    %v92 = vld [vmem:[#allocation5 + $0x2] sm:$0x1]
    %vm93 = vcmp.eq.s32.totalorder %v79, 2
    %v94 = vlaneseq
    %v95 = vshrl.u32 %v94, 7
    %v96 = vsub.s32 0, %v95
    %v97 = vrot.slane %v92, %v96
    %v98 = vsel %vm93, %v97, %v91
    %v99 = vld [vmem:[#allocation5 + $0x3] sm:$0x1]
    %vm100 = vcmp.eq.s32.totalorder %v79, 3
    %v101 = vlaneseq
    %v102 = vshrl.u32 %v101, 7
    %v103 = vsub.s32 0, %v102
    %v104 = vrot.slane %v99, %v103
    %v105 = vsel %vm100, %v104, %v98
    %v106 = vld [vmem:[#allocation5 + $0x4] sm:$0x1]
    %vm107 = vcmp.eq.s32.totalorder %v79, 4
    %v108 = vlaneseq
    %v109 = vshrl.u32 %v108, 7
    %v110 = vsub.s32 0, %v109
    %v111 = vrot.slane %v106, %v110
    %v112 = vsel %vm107, %v111, %v105
    %113 = vst [vmem:[#allocation7] sm:$0xff] %v112
    // Predicated region
    $region18: #{tpu_custom_call.1} parent=1 // pred_check
      _
    $region19: #{tpu_custom_call.1} parent=1 // pred_check_branch
      %115 = sbr.rel (0) target = $region21
    $region20: #{tpu_custom_call.1} parent=1 // pred_region
      %s117 = ssub.s32 128, 32
      %118 = vsyncadd [#allocation4], %s117
      %s119 = sshll.u32 [#allocation7], 4
      %s120 = int_to_ptr.vmem [resolvable:$true] %s119
      %125 = dma.vmem_to_hbm [thread:$0]  %s120, 32, %s2, [#allocation4], 32, 32, 2
    $region21: #{tpu_custom_call.1} parent=1 // pred_fallthru
      _
    // Predicated region
    $region22: #{tpu_custom_call.1} parent=1 // pred_check
      _
    $region23: #{tpu_custom_call.1} parent=1 // pred_check_branch
      %127 = sbr.rel (0) target = $region25
    $region24: #{tpu_custom_call.1} parent=1 // pred_region
      %128 = dma.done [#allocation4], 128
    $region25: #{tpu_custom_call.1} parent=1 // pred_fallthru
      _
    %129 = vsyncpa [#allocation3], 1
    %130 = vsyncpa [#allocation6], 1
    %131 = vsyncpa [#allocation4], 1

</llo_original>
